<compile_context>
chip_gen: v7x
topology: tpu7x:2x2x1
jax: 0.10.0
libtpu: 0.0.40
codegen_flags: <defaults>
</compile_context>

<pallas_src>
import functools

import jax
import jax.numpy as jnp
from jax.experimental import pallas as pl
from jax.experimental.pallas import tpu as pltpu


def _round_up(x, m):
    return m * ((x + m - 1) // m)


def _score_mlp_kernel(z_ref, w1T_ref, b1_ref, w2T_ref, b2_ref, w3T_ref, b3_ref,
                      outT_ref, *, compute_dtype):
    """Fused (normalizer-folded) MLP on one batch tile.

    z_ref arrives batch-major (TB, D); it is transposed on the XLU so every
    matmul and the output store are lane-dense along the batch axis:
      h1 = relu(W1'^T @ z^T + b1')    (H, TB)
      h2 = relu(W2^T  @ h1  + b2 )    (H, TB)
      s  =      W3'^T @ h2  + b3'     (D, TB)   -> unmasked lane-dense store
    Bias add / ReLU stay f32; only matmul operands use compute_dtype.
    """
    zT = jnp.transpose(z_ref[...]).astype(compute_dtype)                 # (D, TB)
    h1 = jnp.dot(w1T_ref[...], zT, preferred_element_type=jnp.float32) + b1_ref[...]
    h1 = jnp.maximum(h1, 0.0)
    h2 = jnp.dot(w2T_ref[...], h1.astype(compute_dtype),
                 preferred_element_type=jnp.float32) + b2_ref[...]
    h2 = jnp.maximum(h2, 0.0)
    s = jnp.dot(w3T_ref[...], h2.astype(compute_dtype),
                preferred_element_type=jnp.float32) + b3_ref[...]
    outT_ref[...] = s.astype(outT_ref.dtype)


def prepare_score_params(params, k_vec, b_vec, *, compute_dtype=jnp.float32):
    """Fold the normalizer into the MLP weights and pre-transpose. Call once.

      zbar = (z - b)/k  =>  zbar @ W1 + b1 = z @ (diag(1/k) W1) + (b1 - (b/k) @ W1)
      (h2 @ W3 + b3)/k  =   h2 @ (W3 * (1/k)[None,:]) + b3/k

    compute_dtype=jnp.bfloat16 enables the native bf16 MXU path on v6e/v7x
    (relaxes accuracy to ~1e-3 rel); default f32 keeps the 2e-5 tolerance.
    """
    inv_k = 1.0 / k_vec
    w1f = params["w1"] * inv_k[:, None]
    b1f = params["b1"] - (b_vec * inv_k) @ params["w1"]
    w3f = params["w3"] * inv_k[None, :]
    b3f = params["b3"] * inv_k
    dim_z, hidden = params["w1"].shape
    return dict(
        w1T=w1f.T.astype(compute_dtype),                    # (H, D)
        w2T=params["w2"].T.astype(compute_dtype),           # (H, H)
        w3T=w3f.T.astype(compute_dtype),                    # (D, H)
        b1=b1f.reshape(hidden, 1).astype(jnp.float32),
        b2=params["b2"].reshape(hidden, 1).astype(jnp.float32),
        b3=b3f.reshape(dim_z, 1).astype(jnp.float32),
        compute_dtype=compute_dtype,
    )


def score_estimator_forward(z, prepared, *, tile_b=4096, out_dtype=jnp.float32):
    """z: (B, dim_z) f32. prepared: output of prepare_score_params. Returns (B, dim_z)."""
    B, dim_z = z.shape
    hidden = prepared["w1T"].shape[0]
    compute_dtype = prepared["compute_dtype"]

    # Batch tile: as big as possible (per-step overhead dominates), multiple of
    # 256 lanes.  On v7x, prefer >= 2 grid steps so both TensorCores get work.
    tb = _round_up(min(tile_b, _round_up(B, 256)), 256)
    if B >= 512:
        tb = min(tb, _round_up(pl.cdiv(B, 2), 256))
    assert tb % 128 == 0 and tb >= 128
    grid = (pl.cdiv(B, tb),)

    const = lambda i: (0, 0)      # weights/biases stay resident across grid steps
    kernel = functools.partial(_score_mlp_kernel, compute_dtype=compute_dtype)

    outT = pl.pallas_call(
        kernel,
        out_shape=jax.ShapeDtypeStruct((dim_z, B), out_dtype),
        grid=grid,
        in_specs=[
            pl.BlockSpec((tb, dim_z), lambda i: (i, 0)),     # z tile, batch-major
            pl.BlockSpec((hidden, dim_z), const),            # W1'^T
            pl.BlockSpec((hidden, 1), const),                # b1'
            pl.BlockSpec((hidden, hidden), const),           # W2^T
            pl.BlockSpec((hidden, 1), const),                # b2
            pl.BlockSpec((dim_z, hidden), const),            # W3'^T
            pl.BlockSpec((dim_z, 1), const),                 # b3'
        ],
        out_specs=pl.BlockSpec((dim_z, tb), lambda i: (0, i)),
        compiler_params=pltpu.CompilerParams(dimension_semantics=("parallel",)),
    )(z, prepared["w1T"], prepared["b1"], prepared["w2T"], prepared["b2"],
      prepared["w3T"], prepared["b3"])

    # Transposed lane-dense layout back to (B, dim_z); callers that can consume
    # the (dim_z, B) layout directly may skip this final small transpose.
    return outT.T


def init_params(key, dim_z, hidden):
    """Deterministic synthetic MLP parameters (net: dim_z -> hidden -> hidden -> dim_z)."""
    k1, k2, k3 = jax.random.split(key, 3)
    scale1 = 1.0 / jnp.sqrt(dim_z)
    scale2 = 1.0 / jnp.sqrt(hidden)
    return {
        "w1": jax.random.normal(k1, (dim_z, hidden), jnp.float32) * scale1,
        "b1": jnp.zeros((hidden,), jnp.float32),
        "w2": jax.random.normal(k2, (hidden, hidden), jnp.float32) * scale2,
        "b2": jnp.zeros((hidden,), jnp.float32),
        "w3": jax.random.normal(k3, (hidden, dim_z), jnp.float32) * scale2,
        "b3": jnp.zeros((dim_z,), jnp.float32),
    }


def reference_forward(z, k_vec, b_vec, params):
    """Pure-JAX reference of the un-folded PyTorch forward."""
    zbar = (z - b_vec[None, :]) / k_vec[None, :]
    h1 = jnp.maximum(zbar @ params["w1"] + params["b1"], 0.0)
    h2 = jnp.maximum(h1 @ params["w2"] + params["b2"], 0.0)
    s = h2 @ params["w3"] + params["b3"]
    return s / k_vec[None, :]


# TODO(synk): evaluate_loss / train_network are training utilities, not part of the
# forward pass, and are intentionally not implemented as kernels.

if __name__ == "__main__":
    dim_x, dim_u = 4, 4
    dim_z = dim_x + dim_u
    hidden = 32
    batch = 8

    root = jax.random.PRNGKey(0)
    kz, kk, kb, kp = jax.random.split(root, 4)

    z = jax.random.normal(kz, (batch, dim_z), jnp.float32)
    # Normalizer constants k (strictly >= 1, nonzero) and b for [x, u].
    k_vec = 1.0 + 0.5 * jax.random.uniform(kk, (dim_z,), jnp.float32)
    b_vec = 0.1 * jax.random.normal(kb, (dim_z,), jnp.float32)
    params = init_params(kp, dim_z, hidden)

    # Hoisted fold: done once, reused across forward calls.
    prepared = prepare_score_params(params, k_vec, b_vec)

    out = score_estimator_forward(z, prepared)
    out = jax.block_until_ready(out)

    ref = reference_forward(z, k_vec, b_vec, params)
    assert out.shape == (batch, dim_z)
    # Folding the normalizer changes rounding order slightly; stays well inside tol.
    assert jnp.allclose(out, ref, atol=2e-5, rtol=1e-4), float(jnp.max(jnp.abs(out - ref)))

    print("KERNEL_OK")
</pallas_src>

<mosaic_0001>
module attributes {stable_mosaic.version = 11 : i64} {
  func.func @_score_mlp_kernel(%arg0: i32, %arg1: memref<256x8xf32, #tpu.memory_space<vmem>>, %arg2: memref<32x8xf32, #tpu.memory_space<vmem>>, %arg3: memref<32x1xf32, #tpu.memory_space<vmem>>, %arg4: memref<32x32xf32, #tpu.memory_space<vmem>>, %arg5: memref<32x1xf32, #tpu.memory_space<vmem>>, %arg6: memref<8x32xf32, #tpu.memory_space<vmem>>, %arg7: memref<8x1xf32, #tpu.memory_space<vmem>>, %arg8: memref<8x256xf32, #tpu.memory_space<vmem>>) attributes {dimension_semantics = [#tpu.dimension_semantics<parallel>], iteration_bounds = array<i64: 1>, scalar_prefetch = 0 : i64, scratch_operands = 0 : i64, tpu.core_type = #tpu.core_type<tc>, window_params = [{transform_indices = @transform_0, window_bounds = array<i64: 256, 8>}, {pipeline_mode = #tpu.pipeline_mode<synchronous>, transform_indices = @transform_1, window_bounds = array<i64: 32, 8>}, {pipeline_mode = #tpu.pipeline_mode<synchronous>, transform_indices = @transform_2, window_bounds = array<i64: 32, 1>}, {pipeline_mode = #tpu.pipeline_mode<synchronous>, transform_indices = @transform_3, window_bounds = array<i64: 32, 32>}, {pipeline_mode = #tpu.pipeline_mode<synchronous>, transform_indices = @transform_4, window_bounds = array<i64: 32, 1>}, {pipeline_mode = #tpu.pipeline_mode<synchronous>, transform_indices = @transform_5, window_bounds = array<i64: 8, 32>}, {pipeline_mode = #tpu.pipeline_mode<synchronous>, transform_indices = @transform_6, window_bounds = array<i64: 8, 1>}, {transform_indices = @transform_7, window_bounds = array<i64: 8, 256>}]} {
    %c0 = arith.constant 0 : index
    %c0_0 = arith.constant 0 : index
    %0 = vector.load %arg1[%c0, %c0_0] : memref<256x8xf32, #tpu.memory_space<vmem>>, vector<256x8xf32>
    %1 = tpu.transpose %0, [1, 0] : vector<256x8xf32> -> vector<8x256xf32>
    %c0_1 = arith.constant 0 : index
    %c0_2 = arith.constant 0 : index
    %2 = vector.load %arg2[%c0_1, %c0_2] : memref<32x8xf32, #tpu.memory_space<vmem>>, vector<32x8xf32>
    %cst = arith.constant dense<0.000000e+00> : vector<32x256xf32>
    %3 = tpu.matmul %2, %1, %cst {dimension_numbers = #tpu.dot_dimension_numbers<[1], [0], [0], [1], [0, 0, 1, 1], [], []>} : vector<32x8xf32>, vector<8x256xf32>, vector<32x256xf32> -> vector<32x256xf32>
    %c0_3 = arith.constant 0 : index
    %c0_4 = arith.constant 0 : index
    %4 = vector.load %arg3[%c0_3, %c0_4] : memref<32x1xf32, #tpu.memory_space<vmem>>, vector<32x1xf32>
    %5 = vector.broadcast %4 : vector<32x1xf32> to vector<32x256xf32>
    %6 = arith.addf %3, %5 : vector<32x256xf32>
    %cst_5 = arith.constant 0.000000e+00 : f32
    %7 = vector.broadcast %cst_5 : f32 to vector<32x256xf32>
    %8 = arith.maximumf %6, %7 : vector<32x256xf32>
    %c0_6 = arith.constant 0 : index
    %c0_7 = arith.constant 0 : index
    %9 = vector.load %arg4[%c0_6, %c0_7] : memref<32x32xf32, #tpu.memory_space<vmem>>, vector<32x32xf32>
    %cst_8 = arith.constant dense<0.000000e+00> : vector<32x256xf32>
    %10 = tpu.matmul %9, %8, %cst_8 {dimension_numbers = #tpu.dot_dimension_numbers<[1], [0], [0], [1], [0, 0, 1, 1], [], []>} : vector<32x32xf32>, vector<32x256xf32>, vector<32x256xf32> -> vector<32x256xf32>
    %c0_9 = arith.constant 0 : index
    %c0_10 = arith.constant 0 : index
    %11 = vector.load %arg5[%c0_9, %c0_10] : memref<32x1xf32, #tpu.memory_space<vmem>>, vector<32x1xf32>
    %12 = vector.broadcast %11 : vector<32x1xf32> to vector<32x256xf32>
    %13 = arith.addf %10, %12 : vector<32x256xf32>
    %cst_11 = arith.constant 0.000000e+00 : f32
    %14 = vector.broadcast %cst_11 : f32 to vector<32x256xf32>
    %15 = arith.maximumf %13, %14 : vector<32x256xf32>
    %c0_12 = arith.constant 0 : index
    %c0_13 = arith.constant 0 : index
    %16 = vector.load %arg6[%c0_12, %c0_13] : memref<8x32xf32, #tpu.memory_space<vmem>>, vector<8x32xf32>
    %cst_14 = arith.constant dense<0.000000e+00> : vector<8x256xf32>
    %17 = tpu.matmul %16, %15, %cst_14 {dimension_numbers = #tpu.dot_dimension_numbers<[1], [0], [0], [1], [0, 0, 1, 1], [], []>} : vector<8x32xf32>, vector<32x256xf32>, vector<8x256xf32> -> vector<8x256xf32>
    %c0_15 = arith.constant 0 : index
    %c0_16 = arith.constant 0 : index
    %18 = vector.load %arg7[%c0_15, %c0_16] : memref<8x1xf32, #tpu.memory_space<vmem>>, vector<8x1xf32>
    %19 = vector.broadcast %18 : vector<8x1xf32> to vector<8x256xf32>
    %20 = arith.addf %17, %19 : vector<8x256xf32>
    %c0_17 = arith.constant 0 : index
    %c0_18 = arith.constant 0 : index
    %21 = vector.load %arg8[%c0_17, %c0_18] : memref<8x256xf32, #tpu.memory_space<vmem>>, vector<8x256xf32>
    tpu.vector_store %arg8[%c0_17, %c0_18], %20 {strides = array<i32>} : memref<8x256xf32, #tpu.memory_space<vmem>>, vector<8x256xf32>,
    return
  }
  func.func @transform_0(%arg0: i32) -> (i32, i32) {
    %c0_i32 = arith.constant 0 : i32
    %c0_i32_0 = arith.constant 0 : i32
    return %arg0, %c0_i32 : i32, i32
  }
  func.func @transform_1(%arg0: i32) -> (i32, i32) {
    %c0_i32 = arith.constant 0 : i32
    %c0_i32_0 = arith.constant 0 : i32
    %c0_i32_1 = arith.constant 0 : i32
    return %c0_i32, %c0_i32_0 : i32, i32
  }
  func.func @transform_2(%arg0: i32) -> (i32, i32) {
    %c0_i32 = arith.constant 0 : i32
    %c0_i32_0 = arith.constant 0 : i32
    %c0_i32_1 = arith.constant 0 : i32
    return %c0_i32, %c0_i32_0 : i32, i32
  }
  func.func @transform_3(%arg0: i32) -> (i32, i32) {
    %c0_i32 = arith.constant 0 : i32
    %c0_i32_0 = arith.constant 0 : i32
    %c0_i32_1 = arith.constant 0 : i32
    return %c0_i32, %c0_i32_0 : i32, i32
  }
  func.func @transform_4(%arg0: i32) -> (i32, i32) {
    %c0_i32 = arith.constant 0 : i32
    %c0_i32_0 = arith.constant 0 : i32
    %c0_i32_1 = arith.constant 0 : i32
    return %c0_i32, %c0_i32_0 : i32, i32
  }
  func.func @transform_5(%arg0: i32) -> (i32, i32) {
    %c0_i32 = arith.constant 0 : i32
    %c0_i32_0 = arith.constant 0 : i32
    %c0_i32_1 = arith.constant 0 : i32
    return %c0_i32, %c0_i32_0 : i32, i32
  }
  func.func @transform_6(%arg0: i32) -> (i32, i32) {
    %c0_i32 = arith.constant 0 : i32
    %c0_i32_0 = arith.constant 0 : i32
    %c0_i32_1 = arith.constant 0 : i32
    return %c0_i32, %c0_i32_0 : i32, i32
  }
  func.func @transform_7(%arg0: i32) -> (i32, i32) {
    %c0_i32 = arith.constant 0 : i32
    %c0_i32_0 = arith.constant 0 : i32
    return %c0_i32, %arg0 : i32, i32
  }
}

</mosaic_0001>

<llo_original>
// kernel: tpu_custom_call.1
$region0: #{tpu_custom_call.1}
  #allocation0 [shape = 'u32[]', space=smem, size = 0x4, offset = 0x4, fixed_abs, tag = 'smem constant byte address 0x4 - core index']
  #allocation1 [shape = 'u32[144,128]{1,0:T(1,128)}', space=vmem, size = 0x12000, scoped, tag = 'internal scratch']
  %s0 = inlined_call_operand.vmem [shape: f32[8,8], index: 0, kind: input, shape index: {}]
  %s1 = inlined_call_operand.vmem [shape: f32[32,8], index: 1, kind: input, shape index: {}]
  %s2 = inlined_call_operand.vmem [shape: f32[32,1], index: 2, kind: input, shape index: {}]
  %s3 = inlined_call_operand.vmem [shape: f32[32,32], index: 3, kind: input, shape index: {}]
  %s4 = inlined_call_operand.vmem [shape: f32[32,1], index: 4, kind: input, shape index: {}]
  %s5 = inlined_call_operand.vmem [shape: f32[8,32], index: 5, kind: input, shape index: {}]
  %s6 = inlined_call_operand.vmem [shape: f32[8,1], index: 6, kind: input, shape index: {}]
  %s7 = inlined_call_operand.hbm [shape: f32[8,8], index: 7, kind: output, shape index: {}]
  %s8 = sld [smem:[#allocation0]]
  $region38: #{tpu_custom_call.1} parent=0
    _
  %s10 = ssub.s32 1, %s8
  %s11 = scalar_select 0, %s10, %s8
  $region1: #{tpu_custom_call.1} parent=0
    #allocation2 [shape = 'u8[8192]{0}', space=vmem, size = 0x2000, scoped, tag = 'output window, operand 0, single buffered']
    #allocation3 [shape = 's32[1]{0}', space=sflag, size = 0x4, scoped, tag = 'scoped memory for tpu_custom_call.1']
    %12 = vsyncpa [#allocation3], 0
    // Predicated region
    $region2: #{tpu_custom_call.1} parent=1 // pred_check
      _
    $region3: #{tpu_custom_call.1} parent=1 // pred_check_branch
      %14 = sbr.rel (0) target = $region5
    $region4: #{tpu_custom_call.1} parent=1 // pred_region
      _
    $region5: #{tpu_custom_call.1} parent=1 // pred_fallthru
      _
    // Predicated region
    $region6: #{tpu_custom_call.1} parent=1 // pred_check
      _
    $region7: #{tpu_custom_call.1} parent=1 // pred_check_branch
      %16 = sbr.rel (0) target = $region9
    $region8: #{tpu_custom_call.1} parent=1 // pred_region
      _
    $region9: #{tpu_custom_call.1} parent=1 // pred_fallthru
      _
    // Predicated region
    $region10: #{tpu_custom_call.1} parent=1 // pred_check
      _
    $region11: #{tpu_custom_call.1} parent=1 // pred_check_branch
      %18 = sbr.rel (0) target = $region13
    $region12: #{tpu_custom_call.1} parent=1 // pred_region
      _
    $region13: #{tpu_custom_call.1} parent=1 // pred_fallthru
      _
    // Predicated region
    $region14: #{tpu_custom_call.1} parent=1 // pred_check
      _
    $region15: #{tpu_custom_call.1} parent=1 // pred_check_branch
      %20 = sbr.rel (0) target = $region17
    $region16: #{tpu_custom_call.1} parent=1 // pred_region
      _
    $region17: #{tpu_custom_call.1} parent=1 // pred_fallthru
      _
    // Predicated region
    $region18: #{tpu_custom_call.1} parent=1 // pred_check
      _
    $region19: #{tpu_custom_call.1} parent=1 // pred_check_branch
      %22 = sbr.rel (0) target = $region21
    $region20: #{tpu_custom_call.1} parent=1 // pred_region
      _
    $region21: #{tpu_custom_call.1} parent=1 // pred_fallthru
      _
    // Predicated region
    $region22: #{tpu_custom_call.1} parent=1 // pred_check
      _
    $region23: #{tpu_custom_call.1} parent=1 // pred_check_branch
      %24 = sbr.rel (0) target = $region25
    $region24: #{tpu_custom_call.1} parent=1 // pred_region
      _
    $region25: #{tpu_custom_call.1} parent=1 // pred_fallthru
      _
    // Predicated region
    $region26: #{tpu_custom_call.1} parent=1 // pred_check
      _
    $region27: #{tpu_custom_call.1} parent=1 // pred_check_branch
      %26 = sbr.rel (0) target = $region29
    $region28: #{tpu_custom_call.1} parent=1 // pred_region
      _
    $region29: #{tpu_custom_call.1} parent=1 // pred_fallthru
      _
    %v27 = vld [vmem:[%s0] sm:$0xff]
    %v28 = vld [vmem:[%s0 + $0x8] sm:$0xff]
    %v29 = vld [vmem:[%s0 + $0x10] sm:$0xff]
    %v30 = vld [vmem:[%s0 + $0x18] sm:$0xff]
    %v31 = vld [vmem:[%s0 + $0x20] sm:$0xff]
    %v32 = vld [vmem:[%s0 + $0x28] sm:$0xff]
    %v33 = vld [vmem:[%s0 + $0x30] sm:$0xff]
    %v34 = vld [vmem:[%s0 + $0x38] sm:$0xff]
    %v35 = vld [vmem:[%s0 + $0x40] sm:$0xff]
    %v36 = vld [vmem:[%s0 + $0x48] sm:$0xff]
    %v37 = vld [vmem:[%s0 + $0x50] sm:$0xff]
    %v38 = vld [vmem:[%s0 + $0x58] sm:$0xff]
    %v39 = vld [vmem:[%s0 + $0x60] sm:$0xff]
    %v40 = vld [vmem:[%s0 + $0x68] sm:$0xff]
    %v41 = vld [vmem:[%s0 + $0x70] sm:$0xff]
    %v42 = vld [vmem:[%s0 + $0x78] sm:$0xff]
    %v43 = vld [vmem:[%s0 + $0x80] sm:$0xff]
    %v44 = vld [vmem:[%s0 + $0x88] sm:$0xff]
    %v45 = vld [vmem:[%s0 + $0x90] sm:$0xff]
    %v46 = vld [vmem:[%s0 + $0x98] sm:$0xff]
    %v47 = vld [vmem:[%s0 + $0xa0] sm:$0xff]
    %v48 = vld [vmem:[%s0 + $0xa8] sm:$0xff]
    %v49 = vld [vmem:[%s0 + $0xb0] sm:$0xff]
    %v50 = vld [vmem:[%s0 + $0xb8] sm:$0xff]
    %v51 = vld [vmem:[%s0 + $0xc0] sm:$0xff]
    %v52 = vld [vmem:[%s0 + $0xc8] sm:$0xff]
    %v53 = vld [vmem:[%s0 + $0xd0] sm:$0xff]
    %v54 = vld [vmem:[%s0 + $0xd8] sm:$0xff]
    %v55 = vld [vmem:[%s0 + $0xe0] sm:$0xff]
    %v56 = vld [vmem:[%s0 + $0xe8] sm:$0xff]
    %v57 = vld [vmem:[%s0 + $0xf0] sm:$0xff]
    %v58 = vld [vmem:[%s0 + $0xf8] sm:$0xff]
    %v59 = vld [vmem:[%s1] sm:$0xff]
    %v60 = vld [vmem:[%s1 + $0x8] sm:$0xff]
    %v61 = vld [vmem:[%s1 + $0x10] sm:$0xff]
    %v62 = vld [vmem:[%s1 + $0x18] sm:$0xff]
    %v63 = vld [vmem:[%s2] sm:$0xff]
    %v64 = vld [vmem:[%s2 + $0x8] sm:$0xff]
    %v65 = vld [vmem:[%s2 + $0x10] sm:$0xff]
    %v66 = vld [vmem:[%s2 + $0x18] sm:$0xff]
    %68 = vset.pattern.permute.xlu0 0
    %69 = vperm.xlu0 %68, %v63
    %v70 = vpop.permute.xlu0 %69
    %73 = vset.pattern.permute.xlu0 0
    %74 = vperm.xlu0 %73, %v64
    %v75 = vpop.permute.xlu0 %74
    %78 = vset.pattern.permute.xlu0 0
    %79 = vperm.xlu0 %78, %v65
    %v80 = vpop.permute.xlu0 %79
    %83 = vset.pattern.permute.xlu0 0
    %84 = vperm.xlu0 %83, %v66
    %v85 = vpop.permute.xlu0 %84
    %vm87 = vcmask 64512
    %v89 = vsel %vm87, %v59, 0
    %v92 = vsel %vm87, %v60, 0
    %v95 = vsel %vm87, %v61, 0
    %v98 = vsel %vm87, %v62, 0
    %v101 = vsel %vm87, %v27, 0
    %v104 = vsel %vm87, %v28, 0
    %v107 = vsel %vm87, %v29, 0
    %v110 = vsel %vm87, %v30, 0
    %v113 = vsel %vm87, %v31, 0
    %v116 = vsel %vm87, %v32, 0
    %v119 = vsel %vm87, %v33, 0
    %v122 = vsel %vm87, %v34, 0
    %v125 = vsel %vm87, %v35, 0
    %v128 = vsel %vm87, %v36, 0
    %v131 = vsel %vm87, %v37, 0
    %v134 = vsel %vm87, %v38, 0
    %v137 = vsel %vm87, %v39, 0
    %v140 = vsel %vm87, %v40, 0
    %v143 = vsel %vm87, %v41, 0
    %v146 = vsel %vm87, %v42, 0
    %v149 = vsel %vm87, %v43, 0
    %v152 = vsel %vm87, %v44, 0
    %v155 = vsel %vm87, %v45, 0
    %v158 = vsel %vm87, %v46, 0
    %v161 = vsel %vm87, %v47, 0
    %v164 = vsel %vm87, %v48, 0
    %v167 = vsel %vm87, %v49, 0
    %v170 = vsel %vm87, %v50, 0
    %v173 = vsel %vm87, %v51, 0
    %v176 = vsel %vm87, %v52, 0
    %v179 = vsel %vm87, %v53, 0
    %v182 = vsel %vm87, %v54, 0
    %v185 = vsel %vm87, %v55, 0
    %v188 = vsel %vm87, %v56, 0
    %v191 = vsel %vm87, %v57, 0
    %v194 = vsel %vm87, %v58, 0
    %196 = vmatprep.subr.mxu0 0.0
    %197 = vmatpush1.xpose.msra.mxu0 %v101
    %198 = vmatprep.subr.mxu0 0.0
    %199 = vmatpush1.xpose.msra.mxu0 %v104
    %200 = vmatprep.subr.mxu0 0.0
    %201 = vmatpush1.xpose.msra.mxu0 %v107
    %202 = vmatprep.subr.mxu0 0.0
    %203 = vmatpush1.xpose.msra.mxu0 %v110
    %204 = vmatprep.subr.mxu0 0.0
    %205 = vmatpush1.xpose.msra.mxu0 %v113
    %206 = vmatprep.subr.mxu0 0.0
    %207 = vmatpush1.xpose.msra.mxu0 %v116
    %208 = vmatprep.subr.mxu0 0.0
    %209 = vmatpush1.xpose.msra.mxu0 %v119
    %210 = vmatprep.subr.mxu0 0.0
    %211 = vmatpush1.xpose.msra.mxu0 %v122
    %212 = vmatprep.subr.mxu0 0.0
    %213 = vmatpush1.xpose.msra.mxu0 %v125
    %214 = vmatprep.subr.mxu0 0.0
    %215 = vmatpush1.xpose.msra.mxu0 %v128
    %216 = vmatprep.subr.mxu0 0.0
    %217 = vmatpush1.xpose.msra.mxu0 %v131
    %218 = vmatprep.subr.mxu0 0.0
    %219 = vmatpush1.xpose.msra.mxu0 %v134
    %220 = vmatprep.subr.mxu0 0.0
    %221 = vmatpush1.xpose.msra.mxu0 %v137
    %222 = vmatprep.subr.mxu0 0.0
    %223 = vmatpush1.xpose.msra.mxu0 %v140
    %224 = vmatprep.subr.mxu0 0.0
    %225 = vmatpush1.xpose.msra.mxu0 %v143
    %226 = vmatprep.subr.mxu0 0.0
    %227 = vmatpush1.xpose.msra.mxu0 %v146
    %228 = vmatprep.subr.mxu0 0.0
    %229 = vmatpush1.xpose.msra.mxu0 %v149
    %230 = vmatprep.subr.mxu0 0.0
    %231 = vmatpush1.xpose.msra.mxu0 %v152
    %232 = vmatprep.subr.mxu0 0.0
    %233 = vmatpush1.xpose.msra.mxu0 %v155
    %234 = vmatprep.subr.mxu0 0.0
    %235 = vmatpush1.xpose.msra.mxu0 %v158
    %236 = vmatprep.subr.mxu0 0.0
    %237 = vmatpush1.xpose.msra.mxu0 %v161
    %238 = vmatprep.subr.mxu0 0.0
    %239 = vmatpush1.xpose.msra.mxu0 %v164
    %240 = vmatprep.subr.mxu0 0.0
    %241 = vmatpush1.xpose.msra.mxu0 %v167
    %242 = vmatprep.subr.mxu0 0.0
    %243 = vmatpush1.xpose.msra.mxu0 %v170
    %244 = vmatprep.subr.mxu0 0.0
    %245 = vmatpush1.xpose.msra.mxu0 %v173
    %246 = vmatprep.subr.mxu0 0.0
    %247 = vmatpush1.xpose.msra.mxu0 %v176
    %248 = vmatprep.subr.mxu0 0.0
    %249 = vmatpush1.xpose.msra.mxu0 %v179
    %250 = vmatprep.subr.mxu0 0.0
    %251 = vmatpush1.xpose.msra.mxu0 %v182
    %252 = vmatprep.subr.mxu0 0.0
    %253 = vmatpush1.xpose.msra.mxu0 %v185
    %254 = vmatprep.subr.mxu0 0.0
    %255 = vmatpush1.xpose.msra.mxu0 %v188
    %256 = vmatprep.subr.mxu0 0.0
    %257 = vmatpush1.xpose.msra.mxu0 %v191
    %258 = vmatprep.subr.mxu0 0.0
    %259 = vmatpush1.xpose.msra.mxu0 %v194
    %260 = vmatprep.mubr.f32.mxu0 0.0
    %261 = vmatmul.mubr.f32.gmra.mrb[0].mxu0 %v89
    %v262 = vpop.f32.mrb[0].mxu0
    %v263 = vadd.f32 %v70, %v262
    %v264 = vpop.f32.mrb[0].mxu0
    %v265 = vadd.f32 %v70, %v264
    %266 = vmatprep.mubr.f32.mxu0 0.0
    %267 = vmatmul.mubr.f32.gmra.mrb[0].mxu0 %v92
    %v268 = vpop.f32.mrb[0].mxu0
    %v269 = vadd.f32 %v75, %v268
    %v270 = vpop.f32.mrb[0].mxu0
    %v271 = vadd.f32 %v75, %v270
    %272 = vmatprep.mubr.f32.mxu0 0.0
    %273 = vmatmul.mubr.f32.gmra.mrb[0].mxu0 %v95
    %v274 = vpop.f32.mrb[0].mxu0
    %v275 = vadd.f32 %v80, %v274
    %v276 = vpop.f32.mrb[0].mxu0
    %v277 = vadd.f32 %v80, %v276
    %278 = vmatprep.mubr.f32.mxu0 0.0
    %279 = vmatmul.mubr.f32.gmra.mrb[0].mxu0 %v98
    %v280 = vpop.f32.mrb[0].mxu0
    %v281 = vadd.f32 %v85, %v280
    %v282 = vpop.f32.mrb[0].mxu0
    %v283 = vadd.f32 %v85, %v282
    %284 = vdwg.mxu0
    %v285 = vmax.f32 %v263, 0.0
    %v286 = vmax.f32 %v265, 0.0
    %v287 = vmax.f32 %v269, 0.0
    %v288 = vmax.f32 %v271, 0.0
    %v289 = vmax.f32 %v275, 0.0
    %v290 = vmax.f32 %v277, 0.0
    %v291 = vmax.f32 %v281, 0.0
    %v292 = vmax.f32 %v283, 0.0
    %v293 = vld [vmem:[%s3] sm:$0xff]
    %v294 = vld [vmem:[%s3 + $0x8] sm:$0xff]
    %v295 = vld [vmem:[%s3 + $0x10] sm:$0xff]
    %v296 = vld [vmem:[%s3 + $0x18] sm:$0xff]
    %v297 = vld [vmem:[%s4] sm:$0xff]
    %v298 = vld [vmem:[%s4 + $0x8] sm:$0xff]
    %v299 = vld [vmem:[%s4 + $0x10] sm:$0xff]
    %v300 = vld [vmem:[%s4 + $0x18] sm:$0xff]
    %302 = vset.pattern.permute.xlu0 0
    %303 = vperm.xlu0 %302, %v297
    %v304 = vpop.permute.xlu0 %303
    %307 = vset.pattern.permute.xlu0 0
    %308 = vperm.xlu0 %307, %v298
    %v309 = vpop.permute.xlu0 %308
    %312 = vset.pattern.permute.xlu0 0
    %313 = vperm.xlu0 %312, %v299
    %v314 = vpop.permute.xlu0 %313
    %317 = vset.pattern.permute.xlu0 0
    %318 = vperm.xlu0 %317, %v300
    %v319 = vpop.permute.xlu0 %318
    %vm321 = vcmask 261120
    %v323 = vsel %vm321, %v293, 0
    %v326 = vsel %vm321, %v294, 0
    %v329 = vsel %vm321, %v295, 0
    %v332 = vsel %vm321, %v296, 0
    %334 = vmatprep.subr.mxu0 %v286
    %335 = vmatpush1.msra.mxu0 %v285
    %336 = vmatprep.subr.mxu0 %v288
    %337 = vmatpush1.msra.mxu0 %v287
    %338 = vmatprep.subr.mxu0 %v290
    %339 = vmatpush1.msra.mxu0 %v289
    %340 = vmatprep.subr.mxu0 %v292
    %341 = vmatpush1.msra.mxu0 %v291
    %342 = vmatprep.subr.mxu0 0.0
    %343 = vmatpush1.msra.mxu0 0.0
    %344 = vmatprep.subr.mxu0 0.0
    %345 = vmatpush1.msra.mxu0 0.0
    %346 = vmatprep.subr.mxu0 0.0
    %347 = vmatpush1.msra.mxu0 0.0
    %348 = vmatprep.subr.mxu0 0.0
    %349 = vmatpush1.msra.mxu0 0.0
    %350 = vmatprep.subr.mxu0 0.0
    %351 = vmatpush1.msra.mxu0 0.0
    %352 = vmatprep.subr.mxu0 0.0
    %353 = vmatpush1.msra.mxu0 0.0
    %354 = vmatprep.subr.mxu0 0.0
    %355 = vmatpush1.msra.mxu0 0.0
    %356 = vmatprep.subr.mxu0 0.0
    %357 = vmatpush1.msra.mxu0 0.0
    %358 = vmatprep.subr.mxu0 0.0
    %359 = vmatpush1.msra.mxu0 0.0
    %360 = vmatprep.subr.mxu0 0.0
    %361 = vmatpush1.msra.mxu0 0.0
    %362 = vmatprep.subr.mxu0 0.0
    %363 = vmatpush1.msra.mxu0 0.0
    %364 = vmatprep.subr.mxu0 0.0
    %365 = vmatpush1.msra.mxu0 0.0
    %366 = vmatprep.subr.mxu0 0.0
    %367 = vmatpush1.msra.mxu0 0.0
    %368 = vmatprep.subr.mxu0 0.0
    %369 = vmatpush1.msra.mxu0 0.0
    %370 = vmatprep.subr.mxu0 0.0
    %371 = vmatpush1.msra.mxu0 0.0
    %372 = vmatprep.subr.mxu0 0.0
    %373 = vmatpush1.msra.mxu0 0.0
    %374 = vmatprep.subr.mxu0 0.0
    %375 = vmatpush1.msra.mxu0 0.0
    %376 = vmatprep.subr.mxu0 0.0
    %377 = vmatpush1.msra.mxu0 0.0
    %378 = vmatprep.subr.mxu0 0.0
    %379 = vmatpush1.msra.mxu0 0.0
    %380 = vmatprep.subr.mxu0 0.0
    %381 = vmatpush1.msra.mxu0 0.0
    %382 = vmatprep.subr.mxu0 0.0
    %383 = vmatpush1.msra.mxu0 0.0
    %384 = vmatprep.subr.mxu0 0.0
    %385 = vmatpush1.msra.mxu0 0.0
    %386 = vmatprep.subr.mxu0 0.0
    %387 = vmatpush1.msra.mxu0 0.0
    %388 = vmatprep.subr.mxu0 0.0
    %389 = vmatpush1.msra.mxu0 0.0
    %390 = vmatprep.subr.mxu0 0.0
    %391 = vmatpush1.msra.mxu0 0.0
    %392 = vmatprep.subr.mxu0 0.0
    %393 = vmatpush1.msra.mxu0 0.0
    %394 = vmatprep.subr.mxu0 0.0
    %395 = vmatpush1.msra.mxu0 0.0
    %396 = vmatprep.subr.mxu0 0.0
    %397 = vmatpush1.msra.mxu0 0.0
    %398 = vmatprep.mubr.f32.mxu0 0.0
    %399 = vmatmul.mubr.f32.gmra.mrb[0].mxu0 %v323
    %v400 = vpop.f32.mrb[0].mxu0
    %v401 = vadd.f32 %v304, %v400
    %v402 = vpop.f32.mrb[0].mxu0
    %v403 = vadd.f32 %v304, %v402
    %404 = vmatprep.mubr.f32.mxu0 0.0
    %405 = vmatmul.mubr.f32.gmra.mrb[0].mxu0 %v326
    %v406 = vpop.f32.mrb[0].mxu0
    %v407 = vadd.f32 %v309, %v406
    %v408 = vpop.f32.mrb[0].mxu0
    %v409 = vadd.f32 %v309, %v408
    %410 = vmatprep.mubr.f32.mxu0 0.0
    %411 = vmatmul.mubr.f32.gmra.mrb[0].mxu0 %v329
    %v412 = vpop.f32.mrb[0].mxu0
    %v413 = vadd.f32 %v314, %v412
    %v414 = vpop.f32.mrb[0].mxu0
    %v415 = vadd.f32 %v314, %v414
    %416 = vmatprep.mubr.f32.mxu0 0.0
    %417 = vmatmul.mubr.f32.gmra.mrb[0].mxu0 %v332
    %v418 = vpop.f32.mrb[0].mxu0
    %v419 = vadd.f32 %v319, %v418
    %v420 = vpop.f32.mrb[0].mxu0
    %v421 = vadd.f32 %v319, %v420
    %422 = vdwg.mxu0
    %v423 = vmax.f32 %v401, 0.0
    %v424 = vmax.f32 %v403, 0.0
    %v425 = vmax.f32 %v407, 0.0
    %v426 = vmax.f32 %v409, 0.0
    %v427 = vmax.f32 %v413, 0.0
    %v428 = vmax.f32 %v415, 0.0
    %v429 = vmax.f32 %v419, 0.0
    %v430 = vmax.f32 %v421, 0.0
    %v431 = vld [vmem:[%s5] sm:$0xff]
    %v432 = vld [vmem:[%s6] sm:$0xff]
    %434 = vset.pattern.permute.xlu0 0
    %435 = vperm.xlu0 %434, %v432
    %v436 = vpop.permute.xlu0 %435
    %v439 = vsel %vm321, %v431, 0
    %441 = vmatprep.subr.mxu0 %v424
    %442 = vmatpush1.msra.mxu0 %v423
    %443 = vmatprep.subr.mxu0 %v426
    %444 = vmatpush1.msra.mxu0 %v425
    %445 = vmatprep.subr.mxu0 %v428
    %446 = vmatpush1.msra.mxu0 %v427
    %447 = vmatprep.subr.mxu0 %v430
    %448 = vmatpush1.msra.mxu0 %v429
    %449 = vmatprep.subr.mxu0 0.0
    %450 = vmatpush1.msra.mxu0 0.0
    %451 = vmatprep.subr.mxu0 0.0
    %452 = vmatpush1.msra.mxu0 0.0
    %453 = vmatprep.subr.mxu0 0.0
    %454 = vmatpush1.msra.mxu0 0.0
    %455 = vmatprep.subr.mxu0 0.0
    %456 = vmatpush1.msra.mxu0 0.0
    %457 = vmatprep.subr.mxu0 0.0
    %458 = vmatpush1.msra.mxu0 0.0
    %459 = vmatprep.subr.mxu0 0.0
    %460 = vmatpush1.msra.mxu0 0.0
    %461 = vmatprep.subr.mxu0 0.0
    %462 = vmatpush1.msra.mxu0 0.0
    %463 = vmatprep.subr.mxu0 0.0
    %464 = vmatpush1.msra.mxu0 0.0
    %465 = vmatprep.subr.mxu0 0.0
    %466 = vmatpush1.msra.mxu0 0.0
    %467 = vmatprep.subr.mxu0 0.0
    %468 = vmatpush1.msra.mxu0 0.0
    %469 = vmatprep.subr.mxu0 0.0
    %470 = vmatpush1.msra.mxu0 0.0
    %471 = vmatprep.subr.mxu0 0.0
    %472 = vmatpush1.msra.mxu0 0.0
    %473 = vmatprep.subr.mxu0 0.0
    %474 = vmatpush1.msra.mxu0 0.0
    %475 = vmatprep.subr.mxu0 0.0
    %476 = vmatpush1.msra.mxu0 0.0
    %477 = vmatprep.subr.mxu0 0.0
    %478 = vmatpush1.msra.mxu0 0.0
    %479 = vmatprep.subr.mxu0 0.0
    %480 = vmatpush1.msra.mxu0 0.0
    %481 = vmatprep.subr.mxu0 0.0
    %482 = vmatpush1.msra.mxu0 0.0
    %483 = vmatprep.subr.mxu0 0.0
    %484 = vmatpush1.msra.mxu0 0.0
    %485 = vmatprep.subr.mxu0 0.0
    %486 = vmatpush1.msra.mxu0 0.0
    %487 = vmatprep.subr.mxu0 0.0
    %488 = vmatpush1.msra.mxu0 0.0
    %489 = vmatprep.subr.mxu0 0.0
    %490 = vmatpush1.msra.mxu0 0.0
    %491 = vmatprep.subr.mxu0 0.0
    %492 = vmatpush1.msra.mxu0 0.0
    %493 = vmatprep.subr.mxu0 0.0
    %494 = vmatpush1.msra.mxu0 0.0
    %495 = vmatprep.subr.mxu0 0.0
    %496 = vmatpush1.msra.mxu0 0.0
    %497 = vmatprep.subr.mxu0 0.0
    %498 = vmatpush1.msra.mxu0 0.0
    %499 = vmatprep.subr.mxu0 0.0
    %500 = vmatpush1.msra.mxu0 0.0
    %501 = vmatprep.subr.mxu0 0.0
    %502 = vmatpush1.msra.mxu0 0.0
    %503 = vmatprep.subr.mxu0 0.0
    %504 = vmatpush1.msra.mxu0 0.0
    %505 = vmatprep.mubr.f32.mxu0 0.0
    %506 = vmatmul.mubr.f32.gmra.mrb[0].mxu0 %v439
    %v507 = vpop.f32.mrb[0].mxu0
    %v508 = vadd.f32 %v436, %v507
    %v509 = vpop.f32.mrb[0].mxu0
    %v510 = vadd.f32 %v436, %v509
    %511 = vdwg.mxu0
    %512 = vst [vmem:[#allocation2] sm:$0xff] %v508
    %513 = vst [vmem:[#allocation2 + $0x8] sm:$0xff] %v510
    // Predicated region
    $region30: #{tpu_custom_call.1} parent=1 // pred_check
      _
    $region31: #{tpu_custom_call.1} parent=1 // pred_check_branch
      %515 = sbr.rel (0) target = $region33
    $region32: #{tpu_custom_call.1} parent=1 // pred_region
      %s517 = ssub.s32 256, 128
      %518 = vsyncadd [#allocation3], %s517
      %s520 = sshll.u32 [#allocation2], 4
      %s521 = int_to_ptr.vmem [resolvable:$true] %s520
      %523 = dma.vmem_to_hbm [thread:$0]  %s521, 128, %s7, [#allocation3]
    $region33: #{tpu_custom_call.1} parent=1 // pred_fallthru
      _
    // Predicated region
    $region34: #{tpu_custom_call.1} parent=1 // pred_check
      _
    $region35: #{tpu_custom_call.1} parent=1 // pred_check_branch
      %525 = sbr.rel (0) target = $region37
    $region36: #{tpu_custom_call.1} parent=1 // pred_region
      %526 = dma.done [#allocation3], 256
    $region37: #{tpu_custom_call.1} parent=1 // pred_fallthru
      _
    %527 = vsyncpa [#allocation3], 1

</llo_original>
